<compile_context>
chip_gen: v5e
topology: v5e:2x2
jax: 0.10.0
libtpu: 0.0.40
codegen_flags: <defaults>
</compile_context>

<pallas_src>
import jax
import jax.numpy as jnp
from jax.experimental import pallas as pl
from jax.experimental.pallas import tpu as pltpu

LANE = 128
_TILE_BYTES = 4 << 20  # ~4 MiB of input per grid step (dtype-independent)


def _mish_kernel(x_ref, o_ref):
    x = x_ref[...]
    xf = x.astype(jnp.float32)
    # Numerically stable softplus: log(1 + e^x) = max(x, 0) + log1p(e^{-|x|}).
    sp = jnp.maximum(xf, 0.0) + jnp.log1p(jnp.exp(-jnp.abs(xf)))
    o_ref[...] = (xf * jnp.tanh(sp)).astype(o_ref.dtype)


def _mish_jnp(x):
    """Plain-JAX Mish for tiny (<128-element) tails."""
    xf = x.astype(jnp.float32)
    sp = jnp.maximum(xf, 0.0) + jnp.log1p(jnp.exp(-jnp.abs(xf)))
    return (xf * jnp.tanh(sp)).astype(x.dtype)


def _mish_slab(slab):
    """Run the Pallas kernel over a lane-dense (rows, 128) slab."""
    rows, lane = slab.shape
    assert lane == LANE
    itemsize = jnp.dtype(slab.dtype).itemsize

    # Sublane packing factor: 8 rows for f32, 16 for bf16, 32 for 8-bit.
    pack = max(8, (32 // (8 * itemsize)) * 8)
    # Fixed tile *bytes* across dtypes so the per-step DMA stays large.
    tile_rows = max(pack, (_TILE_BYTES // (LANE * itemsize)) // pack * pack)
    # tr is either the full row extent (always legal) or a multiple of `pack`.
    tr = min(tile_rows, rows)
    grid = pl.cdiv(rows, tr)  # partial last block is masked by Pallas

    n = rows * LANE
    cost = pl.CostEstimate(
        flops=8 * n,
        transcendentals=3 * n,  # exp, log1p, tanh per element
        bytes_accessed=2 * n * itemsize,
    )

    return pl.pallas_call(
        _mish_kernel,
        out_shape=jax.ShapeDtypeStruct((rows, LANE), slab.dtype),
        grid_spec=pltpu.PrefetchScalarGridSpec(
            num_scalar_prefetch=0,
            grid=(grid,),
            in_specs=[pl.BlockSpec((tr, LANE), lambda i: (i, 0))],
            out_specs=pl.BlockSpec((tr, LANE), lambda i: (i, 0)),
        ),
        compiler_params=pltpu.CompilerParams(
            dimension_semantics=("parallel",),
            # 4 MiB tiles, double-buffered in + out = 16 MiB; leave headroom
            # but stay below v7x's 64 MiB physical VMEM per TensorCore.
            vmem_limit_bytes=40 << 20,
        ),
        cost_estimate=cost,
    )(slab)


def mish_pallas(x):
    """Elementwise Mish: x * tanh(softplus(x)). Same shape/dtype as input."""
    orig_shape = x.shape
    n = x.size
    if n == 0:
        return x

    flat = x.reshape(-1)
    rem = n % LANE
    n_main = n - rem

    if rem == 0:
        # Common conv-activation case: free reshape to a lane-dense slab.
        return _mish_slab(flat.reshape(n // LANE, LANE)).reshape(orig_shape)

    # Unaligned size: kernel on the 128-aligned prefix, tiny jnp expression on
    # the <=127-element tail (no full-tensor pad / slice round-trip).
    parts = []
    if n_main > 0:
        main = _mish_slab(flat[:n_main].reshape(n_main // LANE, LANE))
        parts.append(main.reshape(-1))
    parts.append(_mish_jnp(flat[n_main:]))
    return jnp.concatenate(parts).reshape(orig_shape)


def _mish_ref(x):
    xf = x.astype(jnp.float32)
    sp = jnp.maximum(xf, 0.0) + jnp.log1p(jnp.exp(-jnp.abs(xf)))
    return (xf * jnp.tanh(sp)).astype(x.dtype)


if __name__ == "__main__":
    key = jax.random.PRNGKey(0)

    # 1) f32, NCHW conv-activation-like input (n % 128 == 0).
    x = jax.random.normal(key, (2, 4, 16, 16), dtype=jnp.float32) * 3.0
    y = mish_pallas(x)
    jax.block_until_ready(y)
    y_ref = _mish_ref(x)
    assert y.shape == x.shape and y.dtype == x.dtype
    assert jnp.allclose(y, y_ref, atol=1e-5, rtol=1e-5)

    # 2) bf16 path (f32 upcast inside the kernel, bf16 store).
    xb = x.astype(jnp.bfloat16)
    yb = mish_pallas(xb)
    jax.block_until_ready(yb)
    yb_ref = _mish_ref(xb)
    assert yb.shape == xb.shape and yb.dtype == jnp.bfloat16
    assert jnp.allclose(
        yb.astype(jnp.float32), yb_ref.astype(jnp.float32), atol=2e-2, rtol=2e-2
    )

    # 3) Size not a multiple of 128 (aligned prefix + jnp tail path).
    xs = jax.random.normal(jax.random.PRNGKey(0), (7, 33), dtype=jnp.float32) * 3.0
    ys = mish_pallas(xs)
    jax.block_until_ready(ys)
    assert ys.shape == xs.shape and ys.dtype == xs.dtype
    assert jnp.allclose(ys, _mish_ref(xs), atol=1e-5, rtol=1e-5)

    print("KERNEL_OK")
</pallas_src>

<mosaic_0001>
module attributes {stable_mosaic.version = 11 : i64} {
  func.func @_mish_kernel(%arg0: i32, %arg1: memref<16x128xf32, #tpu.memory_space<vmem>>, %arg2: memref<16x128xf32, #tpu.memory_space<vmem>>) attributes {dimension_semantics = [#tpu.dimension_semantics<parallel>], iteration_bounds = array<i64: 1>, scalar_prefetch = 0 : i64, scratch_operands = 0 : i64, tpu.core_type = #tpu.core_type<tc>, window_params = [{transform_indices = @transform_0, window_bounds = array<i64: 16, 128>}, {transform_indices = @transform_1, window_bounds = array<i64: 16, 128>}]} {
    %c0 = arith.constant 0 : index
    %c0_0 = arith.constant 0 : index
    %0 = vector.load %arg1[%c0, %c0_0] : memref<16x128xf32, #tpu.memory_space<vmem>>, vector<16x128xf32>
    %cst = arith.constant 0.000000e+00 : f32
    %1 = vector.broadcast %cst : f32 to vector<16x128xf32>
    %2 = arith.maximumf %0, %1 : vector<16x128xf32>
    %3 = math.absf %0 : vector<16x128xf32>
    %cst_1 = arith.constant 0.000000e+00 : f32
    %4 = vector.broadcast %cst_1 : f32 to vector<16x128xf32>
    %5 = arith.subf %4, %3 : vector<16x128xf32>
    %6 = math.exp %5 : vector<16x128xf32>
    %7 = math.log1p %6 : vector<16x128xf32>
    %8 = arith.addf %2, %7 : vector<16x128xf32>
    %9 = math.tanh %8 : vector<16x128xf32>
    %10 = arith.mulf %0, %9 : vector<16x128xf32>
    %c0_2 = arith.constant 0 : index
    %c0_3 = arith.constant 0 : index
    %11 = vector.load %arg2[%c0_2, %c0_3] : memref<16x128xf32, #tpu.memory_space<vmem>>, vector<16x128xf32>
    tpu.vector_store %arg2[%c0_2, %c0_3], %10 {strides = array<i32>} : memref<16x128xf32, #tpu.memory_space<vmem>>, vector<16x128xf32>,
    return
  }
  func.func @transform_0(%arg0: i32) -> (i32, i32) {
    %c0_i32 = arith.constant 0 : i32
    %c0_i32_0 = arith.constant 0 : i32
    return %arg0, %c0_i32 : i32, i32
  }
  func.func @transform_1(%arg0: i32) -> (i32, i32) {
    %c0_i32 = arith.constant 0 : i32
    %c0_i32_0 = arith.constant 0 : i32
    return %arg0, %c0_i32 : i32, i32
  }
}

</mosaic_0001>

<llo_original>
// kernel: tpu_custom_call.1
$region0: #{tpu_custom_call.1}
  #allocation0 [shape = 'u32[]', space=smem, size = 0x4, offset = 0x4, fixed_abs, tag = 'smem constant byte address 0x4 - core index']
  #allocation1 [shape = 'u32[72,128]{1,0:T(1,128)}', space=vmem, size = 0x9000, scoped, tag = 'internal scratch']
  %s0 = inlined_call_operand.hbm [shape: f32[16,128], index: 0, kind: input, shape index: {}]
  %s1 = inlined_call_operand.hbm [shape: f32[16,128], index: 1, kind: output, shape index: {}]
  %s2 = sld [smem:[#allocation0]]
  $region18: #{tpu_custom_call.1} parent=0
    _
  %s4 = ssub.s32 1, %s2
  %s5 = scalar_select 0, %s4, %s2
  $region1: #{tpu_custom_call.1} parent=0
    #allocation2 [shape = 'u8[8192]{0}', space=vmem, size = 0x2000, scoped, tag = 'input window, operand 0, single buffered']
    #allocation3 [shape = 's32[1]{0}', space=sflag, size = 0x4, scoped, tag = 'scoped memory for tpu_custom_call.1']
    #allocation4 [shape = 's32[1]{0}', space=sflag, size = 0x4, scoped, tag = 'scoped memory for tpu_custom_call.1']
    #allocation5 [shape = 'u8[8192]{0}', space=vmem, size = 0x2000, scoped, tag = 'output window, operand 0, single buffered']
    %6 = vsyncpa [#allocation3], 0
    %7 = vsyncpa [#allocation4], 0
    // Predicated region
    $region2: #{tpu_custom_call.1} parent=1 // pred_check
      _
    $region3: #{tpu_custom_call.1} parent=1 // pred_check_branch
      %9 = sbr.rel (0) target = $region5
    $region4: #{tpu_custom_call.1} parent=1 // pred_region
      %11 = vsyncadd [#allocation3], 0
      %s12 = sshll.u32 %s0, 4
      %s13 = int_to_ptr.hbm [resolvable:$true] %s12
      %s14 = sshll.u32 [#allocation2], 4
      %s15 = int_to_ptr.vmem [resolvable:$true] %s14
      %20 = dma.hbm_to_vmem [thread:$0]  %s13, 256, %s15, [#allocation3], 128, 128, 8
    $region5: #{tpu_custom_call.1} parent=1 // pred_fallthru
      _
    // Predicated region
    $region6: #{tpu_custom_call.1} parent=1 // pred_check
      _
    $region7: #{tpu_custom_call.1} parent=1 // pred_check_branch
      %22 = sbr.rel (0) target = $region9
    $region8: #{tpu_custom_call.1} parent=1 // pred_region
      %24 = dma.done [#allocation3], 256
    $region9: #{tpu_custom_call.1} parent=1 // pred_fallthru
      _
    %v25 = vld [vmem:[#allocation2] sm:$0xff]
    %v26 = vld [vmem:[#allocation2 + $0x8] sm:$0xff]
    %v27 = vmax.f32 %v25, 0.0
    %v28 = vmax.f32 %v26, 0.0
    %v29 = vand.u32 2147483647, %v25
    %v30 = vand.u32 2147483647, %v26
    %v31 = vsub.f32 0.0, %v29
    %v32 = vsub.f32 0.0, %v30
    %v33 = vmul.f32 %v31, 1.442695
    %v34 = vpow.pop %v33
    %v35 = vmul.f32 %v32, 1.442695
    %v36 = vpow.pop %v35
    %v37 = vadd.f32 %v34, 1.0
    %v38 = vlog2.pop %v37
    %v39 = vmul.f32 %v38, 0.6931472
    %v40 = vmul.f32 -0.5, %v34
    %v41 = vadd.f32 %v40, 1.0
    %v42 = vmul.f32 %v41, %v34
    %v43 = vand.u32 2147483647, %v34
    %vm44 = vcmp.lt.f32.partialorder %v43, 0.0004427343
    %v45 = vsel %vm44, %v42, %v39
    %v46 = vadd.f32 %v36, 1.0
    %v47 = vlog2.pop %v46
    %v48 = vmul.f32 %v47, 0.6931472
    %v49 = vmul.f32 -0.5, %v36
    %v50 = vadd.f32 %v49, 1.0
    %v51 = vmul.f32 %v50, %v36
    %v52 = vand.u32 2147483647, %v36
    %vm53 = vcmp.lt.f32.partialorder %v52, 0.0004427343
    %v54 = vsel %vm53, %v51, %v48
    %v55 = vadd.f32 %v27, %v45
    %v56 = vadd.f32 %v28, %v54
    %v57 = vtanh.pop %v55
    %v58 = vtanh.pop %v56
    %v59 = vmul.f32 %v25, %v57
    %v60 = vmul.f32 %v26, %v58
    %61 = vst [vmem:[#allocation5] sm:$0xff] %v59
    %62 = vst [vmem:[#allocation5 + $0x8] sm:$0xff] %v60
    // Predicated region
    $region10: #{tpu_custom_call.1} parent=1 // pred_check
      _
    $region11: #{tpu_custom_call.1} parent=1 // pred_check_branch
      %64 = sbr.rel (0) target = $region13
    $region12: #{tpu_custom_call.1} parent=1 // pred_region
      %66 = vsyncadd [#allocation4], 0
      %s67 = sshll.u32 [#allocation5], 4
      %s68 = int_to_ptr.vmem [resolvable:$true] %s67
      %s69 = sshll.u32 %s1, 4
      %s70 = int_to_ptr.hbm [resolvable:$true] %s69
      %75 = dma.vmem_to_hbm [thread:$0]  %s68, 256, %s70, [#allocation4], 128, 128, 8
    $region13: #{tpu_custom_call.1} parent=1 // pred_fallthru
      _
    // Predicated region
    $region14: #{tpu_custom_call.1} parent=1 // pred_check
      _
    $region15: #{tpu_custom_call.1} parent=1 // pred_check_branch
      %77 = sbr.rel (0) target = $region17
    $region16: #{tpu_custom_call.1} parent=1 // pred_region
      %79 = dma.done [#allocation4], 256
    $region17: #{tpu_custom_call.1} parent=1 // pred_fallthru
      _
    %80 = vsyncpa [#allocation3], 1
    %81 = vsyncpa [#allocation4], 1

</llo_original>
